<compile_context>
chip_gen: v6e
topology: v6e:2x2x1
jax: 0.10.0
libtpu: 0.0.40
codegen_flags: <defaults>
</compile_context>

<pallas_src>
import math
import jax
import jax.numpy as jnp
from jax.experimental import pallas as pl
from jax.experimental.pallas import tpu as pltpu


def _sigmoid(z):
    # Single EUP push (tanh) instead of exp + reciprocal; exact.
    return 0.5 * (jnp.tanh(0.5 * z) + 1.0)


def _gating_kernel_full(x_ref, w_ref, shift_ref, o_ref):
    # x_ref: (tm, dim); w_ref: (dim, dim) scale-fused; shift_ref: (1, dim) f32.
    x = x_ref[...]
    gates = jnp.dot(x, w_ref[...], preferred_element_type=jnp.float32)   # MXU, f32 acc
    gates = _sigmoid(gates + shift_ref[...])                              # BN shift / bias
    o_ref[...] = (x * gates.astype(x.dtype)).astype(o_ref.dtype)          # gating multiply


def _gating_kernel_cols(x_ref, xg_ref, w_ref, shift_ref, o_ref):
    # x_ref: (tm, dim) LHS (column-invariant); xg_ref: (tm, tn) x columns for the
    # gating multiply; w_ref: (dim, tn); shift_ref: (1, tn); o_ref: (tm, tn).
    gates = jnp.dot(x_ref[...], w_ref[...], preferred_element_type=jnp.float32)
    gates = _sigmoid(gates + shift_ref[...])
    xg = xg_ref[...]
    o_ref[...] = (xg * gates.astype(xg.dtype)).astype(o_ref.dtype)


def _round_up(v, m):
    return ((v + m - 1) // m) * m


def _round_down(v, m):
    return (v // m) * m


def gating_context(x, weights, scale, shift, *, tm=None, tn=None,
                   vmem_budget_bytes=56 << 20):
    """out = x * sigmoid((x @ weights) * scale + shift).

    scale/shift are the fused eval-mode BatchNorm1d affine
    (scale = gamma/sqrt(var+eps), shift = beta - mean*scale), or
    (ones, gating_biases) when add_batch_norm=False.
    """
    N, dim = x.shape
    assert weights.shape == (dim, dim)

    # Fold the per-feature scale into the weights once, in XLA.
    w_fused = (weights * scale[None, :]).astype(weights.dtype)
    shift2 = shift.reshape(1, dim).astype(jnp.float32)

    x_isz = jnp.dtype(x.dtype).itemsize
    w_isz = jnp.dtype(w_fused.dtype).itemsize
    row_align = max(8, 32 // x_isz)          # sublane packing: 8 f32 / 16 bf16 / 32 int8

    budget = int(vmem_budget_bytes)          # <= 64 MiB/TC (v7x), < 128 MiB (v5e/v6e)
    usable = int(budget * 0.85)              # headroom for compiler-internal scratch

    w_fits = dim * dim * w_isz <= usable // 2
    use_cols = (tn is not None and tn < dim) or (not w_fits and dim % 128 == 0)
    # TODO(synk): dim that is neither a 128-multiple nor small enough for a
    # resident (dim, dim) weight would need padded column tiles; not handled here.

    if not use_cols:
        # ---- path A: full (dim, dim) weight resident in VMEM -------------------
        w_bytes = dim * dim * w_isz                          # single-buffered
        if tm is None:
            per_row = dim * (4 * x_isz + 4)                  # 2x-buffered x + out, f32 gates
            tm_cap = max(row_align,
                         _round_down(max(usable - w_bytes, 0) // per_row, row_align))
            tm = min(512, _round_up(N, row_align), tm_cap)
        grid_m = pl.cdiv(N, tm)

        footprint = w_bytes + 4 * tm * dim * x_isz + tm * dim * 4 + dim * 4
        vmem_limit = int(min(budget, footprint + (8 << 20)))

        cost = pl.CostEstimate(
            flops=2 * N * dim * dim,
            transcendentals=N * dim,                         # one tanh per gate
            bytes_accessed=2 * N * dim * x_isz + dim * dim * w_isz + dim * 4)

        grid_spec = pltpu.PrefetchScalarGridSpec(
            num_scalar_prefetch=0,
            grid=(grid_m,),
            in_specs=[
                pl.BlockSpec((tm, dim), lambda i: (i, 0)),             # x row tile
                # grid-invariant blocks: a 2nd buffer buys zero overlap -> single buffer
                pl.BlockSpec((dim, dim), lambda i: (0, 0),
                             pipeline_mode=pl.Buffered(1)),            # fused weights
                pl.BlockSpec((1, dim), lambda i: (0, 0),
                             pipeline_mode=pl.Buffered(1)),            # BN shift / bias
            ],
            out_specs=pl.BlockSpec((tm, dim), lambda i: (i, 0)),
        )
        kernel = _gating_kernel_full
        operands = (x, w_fused, shift2)
        dim_sem = ("parallel",)
    else:
        # ---- path B: weight column-tiled (large dim) ---------------------------
        if tn is None:
            tn = _round_down(usable // 2 // (2 * dim * w_isz), 128)
        tn = min(dim, max(128, _round_down(int(tn), 128)))
        grid_n = pl.cdiv(dim, tn)
        w_bytes = 2 * dim * tn * w_isz                       # double-buffered streaming
        if tm is None:
            per_row = 2 * dim * x_isz + tn * (4 * x_isz + 4)
            tm_cap = max(row_align,
                         _round_down(max(usable - w_bytes, 0) // per_row, row_align))
            tm = min(512, _round_up(N, row_align), tm_cap)
        grid_m = pl.cdiv(N, tm)

        footprint = (w_bytes + 2 * tm * dim * x_isz + 4 * tm * tn * x_isz
                     + tm * tn * 4 + 2 * tn * 4)
        vmem_limit = int(min(budget, footprint + (8 << 20)))

        cost = pl.CostEstimate(
            flops=2 * N * dim * dim,
            transcendentals=N * dim,
            bytes_accessed=(3 * N * dim * x_isz             # x (LHS + gate tile) + out
                            + grid_m * dim * dim * w_isz    # W streamed once per row tile
                            + dim * 4))

        grid_spec = pltpu.PrefetchScalarGridSpec(
            num_scalar_prefetch=0,
            grid=(grid_m, grid_n),
            in_specs=[
                pl.BlockSpec((tm, dim), lambda i, j: (i, 0)),   # LHS, column-invariant
                pl.BlockSpec((tm, tn), lambda i, j: (i, j)),    # x columns for gating mult
                pl.BlockSpec((dim, tn), lambda i, j: (0, j)),   # W column tile
                pl.BlockSpec((1, tn), lambda i, j: (0, j)),     # shift column tile
            ],
            out_specs=pl.BlockSpec((tm, tn), lambda i, j: (i, j)),
        )
        kernel = _gating_kernel_cols
        operands = (x, x, w_fused, shift2)
        dim_sem = ("parallel", "arbitrary")

    return pl.pallas_call(
        kernel,
        out_shape=jax.ShapeDtypeStruct((N, dim), x.dtype),
        grid_spec=grid_spec,
        compiler_params=pltpu.CompilerParams(
            dimension_semantics=dim_sem,
            vmem_limit_bytes=vmem_limit),
        cost_estimate=cost,
    )(*operands)


if __name__ == "__main__":
    key = jax.random.PRNGKey(0)
    k_x, k_w, k_g, k_b, k_rm, k_rv, k_bias, k_x2, k_w2 = jax.random.split(key, 9)

    def reference(x, w, scale, shift):
        gates = jnp.dot(x, w, preferred_element_type=jnp.float32)
        gates = gates * scale[None, :] + shift[None, :]
        return x * jax.nn.sigmoid(gates)

    # ---- case 1: add_batch_norm=True, dim=128 (resident-weight path) ----------
    N, dim = 72, 128
    x = jax.random.normal(k_x, (N, dim), dtype=jnp.float32)
    W = jax.random.normal(k_w, (dim, dim), dtype=jnp.float32) / math.sqrt(dim)
    gamma = 1.0 + 0.1 * jax.random.normal(k_g, (dim,), dtype=jnp.float32)
    beta = 0.1 * jax.random.normal(k_b, (dim,), dtype=jnp.float32)
    running_mean = 0.1 * jax.random.normal(k_rm, (dim,), dtype=jnp.float32)
    running_var = 1.0 + 0.1 * jax.random.uniform(k_rv, (dim,), dtype=jnp.float32)
    eps = 1e-5
    scale = gamma / jnp.sqrt(running_var + eps)
    shift = beta - running_mean * scale
    # TODO(synk): training-mode BN (batch statistics) needs a cross-row reduction
    # pass; eval-mode running-stat BN is fused here instead.

    ref = reference(x, W, scale, shift)

    out = jax.block_until_ready(gating_context(x, W, scale, shift))
    assert jnp.allclose(out, ref, atol=2e-3, rtol=2e-3), "mismatch (single-tile)"

    # same inputs, forced multi-step pipeline with a ragged last row block
    out2 = jax.block_until_ready(gating_context(x, W, scale, shift, tm=32))
    assert jnp.allclose(out2, ref, atol=2e-3, rtol=2e-3), "mismatch (ragged rows)"

    # ---- case 2: add_batch_norm=False, dim=256, column-tiled weight path ------
    N2, dim2 = 40, 256
    x2 = jax.random.normal(k_x2, (N2, dim2), dtype=jnp.float32)
    W2 = jax.random.normal(k_w2, (dim2, dim2), dtype=jnp.float32) / math.sqrt(dim2)
    biases2 = jax.random.normal(k_bias, (dim2,), dtype=jnp.float32) / math.sqrt(dim2)
    scale2 = jnp.ones((dim2,), jnp.float32)

    out3 = jax.block_until_ready(
        gating_context(x2, W2, scale2, biases2, tm=16, tn=128))
    ref3 = reference(x2, W2, scale2, biases2)
    assert jnp.allclose(out3, ref3, atol=2e-3, rtol=2e-3), "mismatch (column-tiled)"

    # Tolerance is for the MXU default-precision f32 matmul vs. the XLA reference;
    # the tanh-form sigmoid itself is exact.
    print("KERNEL_OK")
</pallas_src>

<mosaic_0001>
module attributes {stable_mosaic.version = 11 : i64} {
  func.func @_gating_kernel_full(%arg0: i32, %arg1: memref<72x128xf32, #tpu.memory_space<vmem>>, %arg2: memref<128x128xf32, #tpu.memory_space<vmem>>, %arg3: memref<1x128xf32, #tpu.memory_space<vmem>>, %arg4: memref<72x128xf32, #tpu.memory_space<vmem>>) attributes {dimension_semantics = [#tpu.dimension_semantics<parallel>], iteration_bounds = array<i64: 1>, scalar_prefetch = 0 : i64, scratch_operands = 0 : i64, tpu.core_type = #tpu.core_type<tc>, window_params = [{transform_indices = @transform_0, window_bounds = array<i64: 72, 128>}, {pipeline_mode = #tpu.pipeline_mode<synchronous>, transform_indices = @transform_1, window_bounds = array<i64: 128, 128>}, {pipeline_mode = #tpu.pipeline_mode<synchronous>, transform_indices = @transform_2, window_bounds = array<i64: 1, 128>}, {transform_indices = @transform_3, window_bounds = array<i64: 72, 128>}]} {
    %c0 = arith.constant 0 : index
    %c0_0 = arith.constant 0 : index
    %0 = vector.load %arg1[%c0, %c0_0] : memref<72x128xf32, #tpu.memory_space<vmem>>, vector<72x128xf32>
    %c0_1 = arith.constant 0 : index
    %c0_2 = arith.constant 0 : index
    %1 = vector.load %arg2[%c0_1, %c0_2] : memref<128x128xf32, #tpu.memory_space<vmem>>, vector<128x128xf32>
    %cst = arith.constant dense<0.000000e+00> : vector<72x128xf32>
    %2 = tpu.matmul %0, %1, %cst {dimension_numbers = #tpu.dot_dimension_numbers<[1], [0], [0], [1], [0, 0, 1, 1], [], []>} : vector<72x128xf32>, vector<128x128xf32>, vector<72x128xf32> -> vector<72x128xf32>
    %c0_3 = arith.constant 0 : index
    %c0_4 = arith.constant 0 : index
    %3 = vector.load %arg3[%c0_3, %c0_4] : memref<1x128xf32, #tpu.memory_space<vmem>>, vector<1x128xf32>
    %4 = vector.broadcast %3 : vector<1x128xf32> to vector<72x128xf32>
    %5 = arith.addf %2, %4 : vector<72x128xf32>
    %cst_5 = arith.constant 5.000000e-01 : f32
    %6 = vector.broadcast %cst_5 : f32 to vector<72x128xf32>
    %7 = arith.mulf %6, %5 : vector<72x128xf32>
    %8 = math.tanh %7 : vector<72x128xf32>
    %cst_6 = arith.constant 1.000000e+00 : f32
    %9 = vector.broadcast %cst_6 : f32 to vector<72x128xf32>
    %10 = arith.addf %8, %9 : vector<72x128xf32>
    %cst_7 = arith.constant 5.000000e-01 : f32
    %11 = vector.broadcast %cst_7 : f32 to vector<72x128xf32>
    %12 = arith.mulf %11, %10 : vector<72x128xf32>
    %13 = arith.mulf %0, %12 : vector<72x128xf32>
    %c0_8 = arith.constant 0 : index
    %c0_9 = arith.constant 0 : index
    %14 = vector.load %arg4[%c0_8, %c0_9] : memref<72x128xf32, #tpu.memory_space<vmem>>, vector<72x128xf32>
    tpu.vector_store %arg4[%c0_8, %c0_9], %13 {strides = array<i32>} : memref<72x128xf32, #tpu.memory_space<vmem>>, vector<72x128xf32>,
    return
  }
  func.func @transform_0(%arg0: i32) -> (i32, i32) {
    %c0_i32 = arith.constant 0 : i32
    %c0_i32_0 = arith.constant 0 : i32
    return %arg0, %c0_i32 : i32, i32
  }
  func.func @transform_1(%arg0: i32) -> (i32, i32) {
    %c0_i32 = arith.constant 0 : i32
    %c0_i32_0 = arith.constant 0 : i32
    %c0_i32_1 = arith.constant 0 : i32
    return %c0_i32, %c0_i32_0 : i32, i32
  }
  func.func @transform_2(%arg0: i32) -> (i32, i32) {
    %c0_i32 = arith.constant 0 : i32
    %c0_i32_0 = arith.constant 0 : i32
    %c0_i32_1 = arith.constant 0 : i32
    return %c0_i32, %c0_i32_0 : i32, i32
  }
  func.func @transform_3(%arg0: i32) -> (i32, i32) {
    %c0_i32 = arith.constant 0 : i32
    %c0_i32_0 = arith.constant 0 : i32
    return %arg0, %c0_i32 : i32, i32
  }
}

</mosaic_0001>

<llo_original>
// kernel: tpu_custom_call.1
$region0: #{tpu_custom_call.1}
  #allocation0 [shape = 'u32[]', space=smem, size = 0x4, offset = 0x4, fixed_abs, tag = 'smem constant byte address 0x4 - core index']
  #allocation1 [shape = 'u32[144,128]{1,0:T(1,128)}', space=vmem, size = 0x12000, scoped, tag = 'internal scratch']
  %s0 = inlined_call_operand.hbm [shape: f32[72,128], index: 0, kind: input, shape index: {}]
  %s1 = inlined_call_operand.hbm [shape: f32[128,128], index: 1, kind: input, shape index: {}]
  %s2 = inlined_call_operand.vmem [shape: f32[1,128], index: 2, kind: input, shape index: {}]
  %s3 = inlined_call_operand.hbm [shape: f32[72,128], index: 3, kind: output, shape index: {}]
  %s4 = sld [smem:[#allocation0]]
  $region30: #{tpu_custom_call.1} parent=0
    _
  %s6 = ssub.s32 1, %s4
  %s7 = scalar_select 0, %s6, %s4
  $region1: #{tpu_custom_call.1} parent=0
    #allocation2 [shape = 'u8[36864]{0}', space=vmem, size = 0x9000, scoped, tag = 'input window, operand 0, single buffered']
    #allocation3 [shape = 's32[1]{0}', space=sflag, size = 0x4, scoped, tag = 'scoped memory for tpu_custom_call.1']
    #allocation4 [shape = 's32[1]{0}', space=sflag, size = 0x4, scoped, tag = 'scoped memory for tpu_custom_call.1']
    #allocation5 [shape = 'u8[65536]{0}', space=vmem, size = 0x10000, scoped, tag = 'input window, operand 1, single buffered']
    #allocation6 [shape = 's32[1]{0}', space=sflag, size = 0x4, scoped, tag = 'scoped memory for tpu_custom_call.1']
    #allocation7 [shape = 'u8[36864]{0}', space=vmem, size = 0x9000, scoped, tag = 'output window, operand 0, single buffered']
    %8 = vsyncpa [#allocation3], 0
    %9 = vsyncpa [#allocation6], 0
    %10 = vsyncpa [#allocation4], 0
    // Predicated region
    $region2: #{tpu_custom_call.1} parent=1 // pred_check
      _
    $region3: #{tpu_custom_call.1} parent=1 // pred_check_branch
      %12 = sbr.rel (0) target = $region5
    $region4: #{tpu_custom_call.1} parent=1 // pred_region
      %s14 = ssub.s32 1152, 1152
      %15 = vsyncadd [#allocation3], %s14
      %s16 = sshll.u32 [#allocation2], 4
      %s17 = int_to_ptr.vmem [resolvable:$true] %s16
      %22 = dma.hbm_to_vmem [thread:$0]  %s0, 1152, %s17, [#allocation3], 128, 128, 8
    $region5: #{tpu_custom_call.1} parent=1 // pred_fallthru
      _
    // Predicated region
    $region6: #{tpu_custom_call.1} parent=1 // pred_check
      _
    $region7: #{tpu_custom_call.1} parent=1 // pred_check_branch
      %24 = sbr.rel (0) target = $region9
    $region8: #{tpu_custom_call.1} parent=1 // pred_region
      %s26 = ssub.s32 2048, 2048
      %27 = vsyncadd [#allocation6], %s26
      %s28 = sshll.u32 [#allocation5], 4
      %s29 = int_to_ptr.vmem [resolvable:$true] %s28
      %34 = dma.hbm_to_vmem [thread:$0]  %s1, 2048, %s29, [#allocation6], 128, 128, 8
    $region9: #{tpu_custom_call.1} parent=1 // pred_fallthru
      _
    // Predicated region
    $region10: #{tpu_custom_call.1} parent=1 // pred_check
      _
    $region11: #{tpu_custom_call.1} parent=1 // pred_check_branch
      %36 = sbr.rel (0) target = $region13
    $region12: #{tpu_custom_call.1} parent=1 // pred_region
      _
    $region13: #{tpu_custom_call.1} parent=1 // pred_fallthru
      _
    // Predicated region
    $region14: #{tpu_custom_call.1} parent=1 // pred_check
      _
    $region15: #{tpu_custom_call.1} parent=1 // pred_check_branch
      %38 = sbr.rel (0) target = $region17
    $region16: #{tpu_custom_call.1} parent=1 // pred_region
      %39 = dma.done [#allocation3], 1152
    $region17: #{tpu_custom_call.1} parent=1 // pred_fallthru
      _
    // Predicated region
    $region18: #{tpu_custom_call.1} parent=1 // pred_check
      _
    $region19: #{tpu_custom_call.1} parent=1 // pred_check_branch
      %41 = sbr.rel (0) target = $region21
    $region20: #{tpu_custom_call.1} parent=1 // pred_region
      %42 = dma.done [#allocation6], 2048
    $region21: #{tpu_custom_call.1} parent=1 // pred_fallthru
      _
    %v43 = vld [vmem:[#allocation2] sm:$0xff]
    %v44 = vld [vmem:[#allocation2 + $0x8] sm:$0xff]
    %v45 = vld [vmem:[#allocation2 + $0x10] sm:$0xff]
    %v46 = vld [vmem:[#allocation2 + $0x18] sm:$0xff]
    %v47 = vld [vmem:[#allocation2 + $0x20] sm:$0xff]
    %v48 = vld [vmem:[#allocation2 + $0x28] sm:$0xff]
    %v49 = vld [vmem:[#allocation2 + $0x30] sm:$0xff]
    %v50 = vld [vmem:[#allocation2 + $0x38] sm:$0xff]
    %v51 = vld [vmem:[#allocation2 + $0x40] sm:$0xff]
    %v52 = vld [vmem:[#allocation5] sm:$0xff]
    %v53 = vld [vmem:[#allocation5 + $0x8] sm:$0xff]
    %v54 = vld [vmem:[#allocation5 + $0x10] sm:$0xff]
    %v55 = vld [vmem:[#allocation5 + $0x18] sm:$0xff]
    %v56 = vld [vmem:[#allocation5 + $0x20] sm:$0xff]
    %v57 = vld [vmem:[#allocation5 + $0x28] sm:$0xff]
    %v58 = vld [vmem:[#allocation5 + $0x30] sm:$0xff]
    %v59 = vld [vmem:[#allocation5 + $0x38] sm:$0xff]
    %v60 = vld [vmem:[#allocation5 + $0x40] sm:$0xff]
    %v61 = vld [vmem:[#allocation5 + $0x48] sm:$0xff]
    %v62 = vld [vmem:[#allocation5 + $0x50] sm:$0xff]
    %v63 = vld [vmem:[#allocation5 + $0x58] sm:$0xff]
    %v64 = vld [vmem:[#allocation5 + $0x60] sm:$0xff]
    %v65 = vld [vmem:[#allocation5 + $0x68] sm:$0xff]
    %v66 = vld [vmem:[#allocation5 + $0x70] sm:$0xff]
    %v67 = vld [vmem:[#allocation5 + $0x78] sm:$0xff]
    %v68 = vld [vmem:[%s2] sm:$0x1]
    %v70 = vlaneseq
    %v71 = vshrl.u32 %v70, 7
    %v72 = vsub.s32 0, %v71
    %v73 = vrot.slane %v68, %v72
    %75 = vmatprep.subr.mxu0 0.0
    %76 = vmatpush1.msra.mxu0 %v67
    %77 = vmatprep.subr.mxu0 0.0
    %78 = vmatpush1.msra.mxu0 %v66
    %79 = vmatprep.subr.mxu0 0.0
    %80 = vmatpush1.msra.mxu0 %v65
    %81 = vmatprep.subr.mxu0 0.0
    %82 = vmatpush1.msra.mxu0 %v64
    %83 = vmatprep.subr.mxu0 0.0
    %84 = vmatpush1.msra.mxu0 %v63
    %85 = vmatprep.subr.mxu0 0.0
    %86 = vmatpush1.msra.mxu0 %v62
    %87 = vmatprep.subr.mxu0 0.0
    %88 = vmatpush1.msra.mxu0 %v61
    %89 = vmatprep.subr.mxu0 0.0
    %90 = vmatpush1.msra.mxu0 %v60
    %91 = vmatprep.subr.mxu0 0.0
    %92 = vmatpush1.msra.mxu0 %v59
    %93 = vmatprep.subr.mxu0 0.0
    %94 = vmatpush1.msra.mxu0 %v58
    %95 = vmatprep.subr.mxu0 0.0
    %96 = vmatpush1.msra.mxu0 %v57
    %97 = vmatprep.subr.mxu0 0.0
    %98 = vmatpush1.msra.mxu0 %v56
    %99 = vmatprep.subr.mxu0 0.0
    %100 = vmatpush1.msra.mxu0 %v55
    %101 = vmatprep.subr.mxu0 0.0
    %102 = vmatpush1.msra.mxu0 %v54
    %103 = vmatprep.subr.mxu0 0.0
    %104 = vmatpush1.msra.mxu0 %v53
    %105 = vmatprep.subr.mxu0 0.0
    %106 = vmatpush1.msra.mxu0 %v52
    %107 = vmatprep.subr.mxu0 0.0
    %108 = vmatpush2.msra.mxu0 0.0
    %109 = vmatprep.subr.mxu0 0.0
    %110 = vmatpush2.msra.mxu0 0.0
    %111 = vmatprep.subr.mxu0 0.0
    %112 = vmatpush2.msra.mxu0 0.0
    %113 = vmatprep.subr.mxu0 0.0
    %114 = vmatpush2.msra.mxu0 0.0
    %115 = vmatprep.subr.mxu0 0.0
    %116 = vmatpush2.msra.mxu0 0.0
    %117 = vmatprep.subr.mxu0 0.0
    %118 = vmatpush2.msra.mxu0 0.0
    %119 = vmatprep.subr.mxu0 0.0
    %120 = vmatpush2.msra.mxu0 0.0
    %121 = vmatprep.subr.mxu0 0.0
    %122 = vmatpush2.msra.mxu0 0.0
    %123 = vmatprep.subr.mxu0 0.0
    %124 = vmatpush2.msra.mxu0 0.0
    %125 = vmatprep.subr.mxu0 0.0
    %126 = vmatpush2.msra.mxu0 0.0
    %127 = vmatprep.subr.mxu0 0.0
    %128 = vmatpush2.msra.mxu0 0.0
    %129 = vmatprep.subr.mxu0 0.0
    %130 = vmatpush2.msra.mxu0 0.0
    %131 = vmatprep.subr.mxu0 0.0
    %132 = vmatpush2.msra.mxu0 0.0
    %133 = vmatprep.subr.mxu0 0.0
    %134 = vmatpush2.msra.mxu0 0.0
    %135 = vmatprep.subr.mxu0 0.0
    %136 = vmatpush2.msra.mxu0 0.0
    %137 = vmatprep.subr.mxu0 0.0
    %138 = vmatpush2.msra.mxu0 0.0
    %139 = vmatprep.mubr.f32.mxu0 0.0
    %140 = vmatmul.mubr.f32.gmra.mxu0 %v43
    %v141 = vpop.f32.mrf.mxu0
    %v142 = vadd.f32 %v73, %v141
    %v143 = vpop.f32.mrf.mxu0
    %144 = vmatprep.mubr.f32.mxu0 0.0
    %145 = vmatmul.mubr.f32.gmra.mxu0 %v44
    %v146 = vpop.f32.mrf.mxu0
    %v147 = vadd.f32 %v73, %v146
    %v148 = vpop.f32.mrf.mxu0
    %149 = vmatprep.mubr.f32.mxu0 0.0
    %150 = vmatmul.mubr.f32.gmra.mxu0 %v45
    %v151 = vpop.f32.mrf.mxu0
    %v152 = vadd.f32 %v73, %v151
    %v153 = vpop.f32.mrf.mxu0
    %154 = vmatprep.mubr.f32.mxu0 0.0
    %155 = vmatmul.mubr.f32.gmra.mxu0 %v46
    %v156 = vpop.f32.mrf.mxu0
    %v157 = vadd.f32 %v73, %v156
    %v158 = vpop.f32.mrf.mxu0
    %159 = vmatprep.mubr.f32.mxu0 0.0
    %160 = vmatmul.mubr.f32.gmra.mxu0 %v47
    %v161 = vpop.f32.mrf.mxu0
    %v162 = vadd.f32 %v73, %v161
    %v163 = vpop.f32.mrf.mxu0
    %164 = vmatprep.mubr.f32.mxu0 0.0
    %165 = vmatmul.mubr.f32.gmra.mxu0 %v48
    %v166 = vpop.f32.mrf.mxu0
    %v167 = vadd.f32 %v73, %v166
    %v168 = vpop.f32.mrf.mxu0
    %169 = vmatprep.mubr.f32.mxu0 0.0
    %170 = vmatmul.mubr.f32.gmra.mxu0 %v49
    %v171 = vpop.f32.mrf.mxu0
    %v172 = vadd.f32 %v73, %v171
    %v173 = vpop.f32.mrf.mxu0
    %174 = vmatprep.mubr.f32.mxu0 0.0
    %175 = vmatmul.mubr.f32.gmra.mxu0 %v50
    %v176 = vpop.f32.mrf.mxu0
    %v177 = vadd.f32 %v73, %v176
    %v178 = vpop.f32.mrf.mxu0
    %179 = vmatprep.mubr.f32.mxu0 0.0
    %180 = vmatmul.mubr.f32.gmra.mxu0 %v51
    %v181 = vpop.f32.mrf.mxu0
    %v182 = vadd.f32 %v73, %v181
    %v183 = vpop.f32.mrf.mxu0
    %184 = vdwg.mxu0
    %v185 = vmul.f32 %v142, 0.5
    %v186 = vmul.f32 %v147, 0.5
    %v187 = vmul.f32 %v152, 0.5
    %v188 = vmul.f32 %v157, 0.5
    %v189 = vmul.f32 %v162, 0.5
    %v190 = vmul.f32 %v167, 0.5
    %v191 = vmul.f32 %v172, 0.5
    %v192 = vmul.f32 %v177, 0.5
    %v193 = vmul.f32 %v182, 0.5
    %v194 = vtanh.pop %v185
    %v195 = vtanh.pop %v186
    %v196 = vtanh.pop %v187
    %v197 = vtanh.pop %v188
    %v198 = vtanh.pop %v189
    %v199 = vtanh.pop %v190
    %v200 = vtanh.pop %v191
    %v201 = vtanh.pop %v192
    %v202 = vtanh.pop %v193
    %v203 = vadd.f32 %v194, 1.0
    %v204 = vadd.f32 %v195, 1.0
    %v205 = vadd.f32 %v196, 1.0
    %v206 = vadd.f32 %v197, 1.0
    %v207 = vadd.f32 %v198, 1.0
    %v208 = vadd.f32 %v199, 1.0
    %v209 = vadd.f32 %v200, 1.0
    %v210 = vadd.f32 %v201, 1.0
    %v211 = vadd.f32 %v202, 1.0
    %v212 = vmul.f32 %v203, 0.5
    %v213 = vmul.f32 %v204, 0.5
    %v214 = vmul.f32 %v205, 0.5
    %v215 = vmul.f32 %v206, 0.5
    %v216 = vmul.f32 %v207, 0.5
    %v217 = vmul.f32 %v208, 0.5
    %v218 = vmul.f32 %v209, 0.5
    %v219 = vmul.f32 %v210, 0.5
    %v220 = vmul.f32 %v211, 0.5
    %v221 = vmul.f32 %v43, %v212
    %v222 = vmul.f32 %v44, %v213
    %v223 = vmul.f32 %v45, %v214
    %v224 = vmul.f32 %v46, %v215
    %v225 = vmul.f32 %v47, %v216
    %v226 = vmul.f32 %v48, %v217
    %v227 = vmul.f32 %v49, %v218
    %v228 = vmul.f32 %v50, %v219
    %v229 = vmul.f32 %v51, %v220
    %230 = vst [vmem:[#allocation7] sm:$0xff] %v221
    %231 = vst [vmem:[#allocation7 + $0x8] sm:$0xff] %v222
    %232 = vst [vmem:[#allocation7 + $0x10] sm:$0xff] %v223
    %233 = vst [vmem:[#allocation7 + $0x18] sm:$0xff] %v224
    %234 = vst [vmem:[#allocation7 + $0x20] sm:$0xff] %v225
    %235 = vst [vmem:[#allocation7 + $0x28] sm:$0xff] %v226
    %236 = vst [vmem:[#allocation7 + $0x30] sm:$0xff] %v227
    %237 = vst [vmem:[#allocation7 + $0x38] sm:$0xff] %v228
    %238 = vst [vmem:[#allocation7 + $0x40] sm:$0xff] %v229
    // Predicated region
    $region22: #{tpu_custom_call.1} parent=1 // pred_check
      _
    $region23: #{tpu_custom_call.1} parent=1 // pred_check_branch
      %240 = sbr.rel (0) target = $region25
    $region24: #{tpu_custom_call.1} parent=1 // pred_region
      %s242 = ssub.s32 1152, 1152
      %243 = vsyncadd [#allocation4], %s242
      %s244 = sshll.u32 [#allocation7], 4
      %s245 = int_to_ptr.vmem [resolvable:$true] %s244
      %250 = dma.vmem_to_hbm [thread:$0]  %s245, 1152, %s3, [#allocation4], 128, 128, 8
    $region25: #{tpu_custom_call.1} parent=1 // pred_fallthru
      _
    // Predicated region
    $region26: #{tpu_custom_call.1} parent=1 // pred_check
      _
    $region27: #{tpu_custom_call.1} parent=1 // pred_check_branch
      %252 = sbr.rel (0) target = $region29
    $region28: #{tpu_custom_call.1} parent=1 // pred_region
      %253 = dma.done [#allocation4], 1152
    $region29: #{tpu_custom_call.1} parent=1 // pred_fallthru
      _
    %254 = vsyncpa [#allocation3], 1
    %255 = vsyncpa [#allocation6], 1
    %256 = vsyncpa [#allocation4], 1

</llo_original>
